<compile_context>
chip_gen: v6e
topology: v6e:2x2x1
jax: 0.10.0
libtpu: 0.0.40
codegen_flags: <defaults>
</compile_context>

<pallas_src>
import functools

import jax
import jax.numpy as jnp
from jax.experimental import pallas as pl
from jax.experimental.pallas import tpu as pltpu


# --------------------------------------------------------------------------- #
# Kernels
# --------------------------------------------------------------------------- #
def _pool_kernel(x_ref, sum_ref, *, hw, hw_tile, mask_lanes):
    """x_ref: (row_tile, hw_tile) tile of the flat (B*C, HW) input.
    sum_ref: (row_tile, 1) f32 accumulator resident across the hw axis."""
    t = pl.program_id(1)

    @pl.when(t == 0)
    def _():
        sum_ref[...] = jnp.zeros_like(sum_ref)

    x = x_ref[...].astype(jnp.float32)          # f32 accumulation (bf16-safe)
    if mask_lanes:
        # Ragged last HW tile: out-of-bounds lanes are unspecified — zero them
        # before summing so the pooled sum stays exact.
        lane = jax.lax.broadcasted_iota(jnp.int32, x.shape, 1)
        x = jnp.where(lane < (hw - t * hw_tile), x, 0.0)
    sum_ref[...] += jnp.sum(x, axis=-1, keepdims=True)


def _scale_kernel(x_ref, gate_ref, o_ref):
    """x_ref, o_ref: (row_tile, hw_tile); gate_ref: (row_tile, 1) in x.dtype.
    Multiply in the input dtype (bf16 native on v6e/v7x; exact for f32).
    Garbage in out-of-bounds lanes/rows of ragged tiles is dropped on store."""
    o_ref[...] = x_ref[...] * gate_ref[...]


# --------------------------------------------------------------------------- #
# Tiling helpers
# --------------------------------------------------------------------------- #
def _round_down(a, m):
    return (a // m) * m


def _round_up(a, m):
    return ((a + m - 1) // m) * m


def _vmem_capacity_bytes():
    try:
        return int(pltpu.get_tpu_info().vmem_capacity_bytes)
    except Exception:  # interpret mode / older runtimes: conservative default
        return 64 * 1024 * 1024


def _pick_tiles(n_rows, hw, elem, block_budget_bytes):
    """Pick (row_tile, hw_tile) for a flat (n_rows, hw) array so one block is
    ~block_budget_bytes.  Prefers hw_tile == hw (each block row is a single
    contiguous HBM stretch); block dims respect the (8, 128) rule."""
    sub = max(8, 32 // max(elem, 1))             # 8 f32 / 16 bf16 / 32 int8
    rows_fit = max(1, block_budget_bytes // max(hw * elem, 1))

    if rows_fit >= min(n_rows, sub):
        hw_tile = hw                              # full lane dim: contiguous DMA
        if rows_fit >= n_rows:
            row_tile = n_rows                     # whole row dim (always legal)
            if n_rows >= 2 * sub:                 # expose >=2 row blocks (megacore)
                row_tile = _round_up(pl.cdiv(n_rows, 2), sub)
        else:
            row_tile = max(sub, _round_down(rows_fit, sub))
        return row_tile, hw_tile

    # Whole-HW rows don't fit the budget: minimal sublane rows, tile lanes in
    # multiples of 128 as large as the budget allows (no artificial cap).
    row_tile = n_rows if n_rows < sub else sub
    lanes_fit = block_budget_bytes // max(row_tile * elem, 1)
    hw_tile = max(128, _round_down(lanes_fit, 128))
    hw_tile = min(hw_tile, _round_up(hw, 128))
    return row_tile, hw_tile


# --------------------------------------------------------------------------- #
# Wrapper
# --------------------------------------------------------------------------- #
def channel_attention(x, w1, w2):
    """x: (B, C, H, W); w1: (C//r, C); w2: (C, C//r) — PyTorch Linear layouts,
    no bias.  Returns x * sigmoid(fc2(relu(fc1(mean_hw(x)))))."""
    B, C, H, W = x.shape
    HW = H * W
    N = B * C
    elem = x.dtype.itemsize

    cap = _vmem_capacity_bytes()
    # Explicit scoped-VMEM limit (defaults are only 16/32 MiB; physical 64-128).
    vmem_limit = min(int(0.70 * cap), 96 * 1024 * 1024)
    usable = int(0.80 * vmem_limit)               # headroom for Mosaic scratch
    p1_block_bytes = usable // 2                  # pass 1: input double-buffered
    p2_block_bytes = usable // 4                  # pass 2: input + output buffered

    x2 = x.reshape(N, HW)                         # free view: (B*C, HW)

    # ---- pass 1: global average pool (sum), grid = (row blocks, hw blocks) --
    r1, h1 = _pick_tiles(N, HW, elem, p1_block_bytes)
    sums = pl.pallas_call(
        functools.partial(_pool_kernel, hw=HW, hw_tile=h1,
                          mask_lanes=(HW % h1) != 0),
        out_shape=jax.ShapeDtypeStruct((N, 1), jnp.float32),
        grid_spec=pltpu.PrefetchScalarGridSpec(
            num_scalar_prefetch=0,
            grid=(pl.cdiv(N, r1), pl.cdiv(HW, h1)),
            in_specs=[pl.BlockSpec((r1, h1), lambda r, t: (r, t))],
            out_specs=pl.BlockSpec((r1, 1), lambda r, t: (r, 0)),
        ),
        compiler_params=pltpu.CompilerParams(
            dimension_semantics=("parallel", "arbitrary"),
            vmem_limit_bytes=vmem_limit),
        cost_estimate=pl.CostEstimate(
            flops=N * HW, transcendentals=0,
            bytes_accessed=N * HW * elem + N * 4),
    )(x2)

    # ---- excite: tiny batched MLP on (B, C) — plain JAX (hoisted) -----------
    # TODO(synk): could be fused into pass 1's final grid step to save a few
    # dispatches, at the cost of tying row tiling to whole batches.
    pooled = sums.reshape(B, C) * (1.0 / HW)                  # true mean
    hidden = jnp.maximum(pooled @ w1.T, 0.0)                  # (B, C//r)
    gate = jax.nn.sigmoid(hidden @ w2.T)                      # (B, C)
    gate2 = gate.reshape(N, 1).astype(x.dtype)

    # ---- pass 2: per-channel scale, both grid axes parallel (megacore) ------
    r2, h2 = _pick_tiles(N, HW, elem, p2_block_bytes)
    out = pl.pallas_call(
        _scale_kernel,
        out_shape=jax.ShapeDtypeStruct((N, HW), x.dtype),
        grid_spec=pltpu.PrefetchScalarGridSpec(
            num_scalar_prefetch=0,
            grid=(pl.cdiv(N, r2), pl.cdiv(HW, h2)),
            in_specs=[pl.BlockSpec((r2, h2), lambda r, t: (r, t)),
                      pl.BlockSpec((r2, 1), lambda r, t: (r, 0))],
            out_specs=pl.BlockSpec((r2, h2), lambda r, t: (r, t)),
        ),
        compiler_params=pltpu.CompilerParams(
            dimension_semantics=("parallel", "parallel"),
            vmem_limit_bytes=vmem_limit),
        cost_estimate=pl.CostEstimate(
            flops=N * HW, transcendentals=0,
            bytes_accessed=2 * N * HW * elem + 2 * N * elem),
    )(x2, gate2)

    return out.reshape(B, C, H, W)


# --------------------------------------------------------------------------- #
# Reference + demo
# --------------------------------------------------------------------------- #
def _reference(x, w1, w2):
    pooled = jnp.mean(x, axis=(2, 3))                         # (B, C)
    h = jnp.maximum(pooled @ w1.T, 0.0)                       # (B, C//r)
    s = jax.nn.sigmoid(h @ w2.T)                              # (B, C)
    return x * s[:, :, None, None]


if __name__ == "__main__":
    B, C, H, W = 2, 4, 16, 16
    reduction = 2
    Cr = C // reduction

    key = jax.random.PRNGKey(0)
    kx, k1, k2 = jax.random.split(key, 3)

    x = jax.random.normal(kx, (B, C, H, W), dtype=jnp.float32)
    # PyTorch Linear weight shapes (out_features, in_features), no bias.
    w1 = 0.3 * jax.random.normal(k1, (Cr, C), dtype=jnp.float32)
    w2 = 0.3 * jax.random.normal(k2, (C, Cr), dtype=jnp.float32)

    out = channel_attention(x, w1, w2)
    out = jax.block_until_ready(out)

    ref = _reference(x, w1, w2)
    assert out.shape == (B, C, H, W)
    assert jnp.allclose(out, ref, atol=1e-5, rtol=1e-5), "mismatch vs reference"

    print("KERNEL_OK")
</pallas_src>

<mosaic_0001>
module attributes {stable_mosaic.version = 11 : i64} {
  func.func @_pool_kernel(%arg0: i32, %arg1: i32, %arg2: memref<8x256xf32, #tpu.memory_space<vmem>>, %arg3: memref<8x1xf32, #tpu.memory_space<vmem>>) attributes {dimension_semantics = [#tpu.dimension_semantics<parallel>, #tpu.dimension_semantics<arbitrary>], iteration_bounds = array<i64: 1, 1>, scalar_prefetch = 0 : i64, scratch_operands = 0 : i64, tpu.core_type = #tpu.core_type<tc>, window_params = [{transform_indices = @transform_0, window_bounds = array<i64: 8, 256>}, {transform_indices = @transform_1, window_bounds = array<i64: 8, 1>}]} {
    %c0_i32 = arith.constant 0 : i32
    %0 = arith.cmpi eq, %arg1, %c0_i32 : i32
    %1 = arith.extui %0 : i1 to i32
    %c0_i32_0 = arith.constant 0 : i32
    %2 = arith.cmpi ne, %1, %c0_i32_0 : i32
    scf.if %2 {
      %cst_6 = arith.constant 0.000000e+00 : f32
      %9 = vector.broadcast %cst_6 : f32 to vector<8x1xf32>
      %c0_7 = arith.constant 0 : index
      %c0_8 = arith.constant 0 : index
      %10 = vector.load %arg3[%c0_7, %c0_8] : memref<8x1xf32, #tpu.memory_space<vmem>>, vector<8x1xf32>
      tpu.vector_store %arg3[%c0_7, %c0_8], %9 {strides = array<i32>} : memref<8x1xf32, #tpu.memory_space<vmem>>, vector<8x1xf32>,
    } else {
    }
    %c0 = arith.constant 0 : index
    %c0_1 = arith.constant 0 : index
    %3 = vector.load %arg2[%c0, %c0_1] : memref<8x256xf32, #tpu.memory_space<vmem>>, vector<8x256xf32>
    %c0_2 = arith.constant 0 : index
    %c0_3 = arith.constant 0 : index
    %4 = vector.load %arg3[%c0_2, %c0_3] : memref<8x1xf32, #tpu.memory_space<vmem>>, vector<8x1xf32>
    %cst = arith.constant dense<0.000000e+00> : vector<8xf32>
    %5 = vector.multi_reduction <add>, %3, %cst [1] : vector<8x256xf32> to vector<8xf32>
    %6 = vector.shape_cast %5 : vector<8xf32> to vector<8x1xf32>
    %7 = arith.addf %4, %6 : vector<8x1xf32>
    %c0_4 = arith.constant 0 : index
    %c0_5 = arith.constant 0 : index
    %8 = vector.load %arg3[%c0_4, %c0_5] : memref<8x1xf32, #tpu.memory_space<vmem>>, vector<8x1xf32>
    tpu.vector_store %arg3[%c0_4, %c0_5], %7 {strides = array<i32>} : memref<8x1xf32, #tpu.memory_space<vmem>>, vector<8x1xf32>,
    return
  }
  func.func @transform_0(%arg0: i32, %arg1: i32) -> (i32, i32) {
    %c0_i32 = arith.constant 0 : i32
    return %arg0, %arg1 : i32, i32
  }
  func.func @transform_1(%arg0: i32, %arg1: i32) -> (i32, i32) {
    %c0_i32 = arith.constant 0 : i32
    %c0_i32_0 = arith.constant 0 : i32
    return %arg0, %c0_i32 : i32, i32
  }
}

</mosaic_0001>

<llo_original>
// kernel: tpu_custom_call.1
$region0: #{tpu_custom_call.1}
  #allocation0 [shape = 'u32[]', space=smem, size = 0x4, offset = 0x4, fixed_abs, tag = 'smem constant byte address 0x4 - core index']
  #allocation1 [shape = 'u32[144,128]{1,0:T(1,128)}', space=vmem, size = 0x12000, scoped, tag = 'internal scratch']
  %s0 = inlined_call_operand.hbm [shape: f32[8,256], index: 0, kind: input, shape index: {}]
  %s1 = inlined_call_operand.vmem [shape: f32[8,1], index: 1, kind: output, shape index: {}]
  %s2 = sld [smem:[#allocation0]]
  $region22: #{tpu_custom_call.1} parent=0
    _
  %s4 = ssub.s32 1, %s2
  %s5 = scalar_select 0, %s4, %s2
  $region1: #{tpu_custom_call.1} parent=0
    #allocation2 [shape = 'u8[8192]{0}', space=vmem, size = 0x2000, scoped, tag = 'input window, operand 0, single buffered']
    #allocation3 [shape = 's32[1]{0}', space=sflag, size = 0x4, scoped, tag = 'scoped memory for tpu_custom_call.1']
    %6 = vsyncpa [#allocation3], 0
    // Predicated region
    $region2: #{tpu_custom_call.1} parent=1 // pred_check
      _
    $region3: #{tpu_custom_call.1} parent=1 // pred_check_branch
      %8 = sbr.rel (0) target = $region5
    $region4: #{tpu_custom_call.1} parent=1 // pred_region
      %s10 = ssub.s32 256, 256
      %11 = vsyncadd [#allocation3], %s10
      %s13 = sshll.u32 [#allocation2], 4
      %s14 = int_to_ptr.vmem [resolvable:$true] %s13
      %16 = dma.hbm_to_vmem [thread:$0]  %s0, 256, %s14, [#allocation3]
    $region5: #{tpu_custom_call.1} parent=1 // pred_fallthru
      _
    // Predicated region
    $region6: #{tpu_custom_call.1} parent=1 // pred_check
      _
    $region7: #{tpu_custom_call.1} parent=1 // pred_check_branch
      %18 = sbr.rel (0) target = $region9
    $region8: #{tpu_custom_call.1} parent=1 // pred_region
      %19 = dma.done [#allocation3], 256
    $region9: #{tpu_custom_call.1} parent=1 // pred_fallthru
      _
    %p20 = scmp.eq.s32.totalorder 0, 0
    // Predicated region
    $region10: #{tpu_custom_call.1} parent=1 // pred_check
      %p21 = pneg %p20
    $region11: #{tpu_custom_call.1} parent=1 // pred_check_branch
      %23 = sbr.rel (%p21) target = $region13
    $region12: #{tpu_custom_call.1} parent=1 // pred_region
      %vm24 = vcmask 7168
      %25 = vst.msk [vmem:[%s1] sm:$0xff] %vm24, 0.0
    $region13: #{tpu_custom_call.1} parent=1 // pred_fallthru
      _
    %v26 = vld [vmem:[#allocation2] sm:$0xff]
    %v27 = vld [vmem:[#allocation2 + $0x8] sm:$0xff]
    %v28 = vld [vmem:[%s1] sm:$0xff]
    %v29 = vadd.f32 %v26, %v27
    %30 = vadd.xlane.f32.xlu0 %v29
    %v31 = vpop.xlane.xlu0 %30
    %v32 = vadd.f32 %v28, %v31
    %vm33 = vcmask 7168
    %34 = vst.msk [vmem:[%s1] sm:$0xff] %vm33, %v32
    // Predicated region
    $region14: #{tpu_custom_call.1} parent=1 // pred_check
      _
    $region15: #{tpu_custom_call.1} parent=1 // pred_check_branch
      %36 = sbr.rel (0) target = $region17
    $region16: #{tpu_custom_call.1} parent=1 // pred_region
      _
    $region17: #{tpu_custom_call.1} parent=1 // pred_fallthru
      _
    // Predicated region
    $region18: #{tpu_custom_call.1} parent=1 // pred_check
      _
    $region19: #{tpu_custom_call.1} parent=1 // pred_check_branch
      %38 = sbr.rel (0) target = $region21
    $region20: #{tpu_custom_call.1} parent=1 // pred_region
      _
    $region21: #{tpu_custom_call.1} parent=1 // pred_fallthru
      _
    %39 = vsyncpa [#allocation3], 1

</llo_original>
